<compile_context>
chip_gen: v7x
topology: tpu7x:2x2x1
jax: 0.10.0
libtpu: 0.0.40
codegen_flags: <defaults>
</compile_context>

<pallas_src>
import jax
import jax.numpy as jnp
from jax.experimental import pallas as pl
from jax.experimental.pallas import tpu as pltpu

_LANE = 128


def _vmem_capacity_bytes():
    try:
        return int(pltpu.get_tpu_info().vmem_capacity_bytes)
    except Exception:
        return 64 * 1024 * 1024  # conservative fallback (v7x per-TensorCore)


def _pick_tile_r(C, R, in_itemsize, budget_bytes, sublane):
    """Rows-of-128-lanes per block, budgeted against the in-kernel f32 working
    set: 2x double-buffered native-dtype logits block + ~5 live full-block f32
    temporaries + the (double-buffered) int32 target rows."""
    per_row = C * _LANE * (2 * in_itemsize + 5 * 4) + 2 * _LANE * 4
    tile = max(int(budget_bytes // per_row), 1)
    tile = max((tile // sublane) * sublane, sublane)
    if tile >= R:
        return R  # full-extent block is always layout-legal
    return tile


def _make_ce_dice_kernel(num_classes, pixels_per_image):
    C = num_classes

    def kernel(logits_ref, target_ref, ce_ref, inter_ref, prob_ref, cnt_ref):
        r = pl.program_id(1)

        @pl.when(r == 0)
        def _():
            ce_ref[...] = jnp.zeros_like(ce_ref)
            inter_ref[...] = jnp.zeros_like(inter_ref)
            prob_ref[...] = jnp.zeros_like(prob_ref)
            cnt_ref[...] = jnp.zeros_like(cnt_ref)

        tgt = target_ref[0]                                  # (TR, 128) int32
        TR, L = tgt.shape

        # Validity: real (non-padded, in-bounds) pixels with in-range labels.
        row_ids = jax.lax.broadcasted_iota(jnp.int32, (TR, L), 0)
        lane_ids = jax.lax.broadcasted_iota(jnp.int32, (TR, L), 1)
        flat = (r * TR + row_ids) * L + lane_ids
        valid = jnp.logical_and(
            flat < pixels_per_image,
            jnp.logical_and(tgt >= 0, tgt < C))

        logits = logits_ref[0].astype(jnp.float32)           # (C, TR, 128)
        logits = jnp.where(valid[None], logits, 0.0)         # sanitize padding

        # Softmax statistics over the leading class axis: dense VPU work, no
        # XLU sublane reductions; sublanes stay packed with spatial rows.
        m = jnp.max(logits, axis=0)                          # (TR, 128)
        e = jnp.exp(logits - m[None])                        # (C, TR, 128)
        s = jnp.sum(e, axis=0)                               # (TR, 128)
        inv_s = pl.reciprocal(s, approx=True)                # EUP slot
        inv_s = inv_s * (2.0 - s * inv_s)                    # one Newton step

        # Boolean class mask (no float one-hot), pre-gated by validity.
        class_ids = jax.lax.broadcasted_iota(jnp.int32, (C, TR, L), 0)
        mask = jnp.logical_and(class_ids == tgt[None], valid[None])

        # Cross entropy: -log_softmax[target] = log(s) + m - logit[target]
        logit_tgt = jnp.sum(jnp.where(mask, logits, 0.0), axis=0)
        ce_pix = jnp.where(valid, jnp.log(s) + m - logit_tgt, 0.0)
        ce_ref[...] = ce_ref[...] + jnp.sum(ce_pix, keepdims=True)[None]

        # Dice partial sums per class (softmax zeroed at invalid pixels).
        w = inv_s * valid.astype(jnp.float32)                # (TR, 128)
        ew = e * w[None]                                     # (C, TR, 128)
        prob_p = jnp.sum(jnp.sum(ew, axis=2), axis=1, keepdims=True)      # (C,1)
        inter_p = jnp.sum(jnp.sum(jnp.where(mask, ew, 0.0), axis=2),
                          axis=1, keepdims=True)                          # (C,1)
        cnt_p = jnp.sum(jnp.sum(mask.astype(jnp.float32), axis=2),
                        axis=1, keepdims=True)                            # (C,1)

        prob_ref[...] = prob_ref[...] + prob_p[None]
        inter_ref[...] = inter_ref[...] + inter_p[None]
        cnt_ref[...] = cnt_ref[...] + cnt_p[None]

    return kernel


def _ce_dice_loss(pred, target):
    """pred: [N, C, H, W] float logits, target: [N, H, W] integer labels."""
    N, C, H, W = pred.shape
    P = H * W
    P_pad = -(-P // _LANE) * _LANE
    R = P_pad // _LANE

    logits = pred.reshape(N, C, P)
    tgt = target.astype(jnp.int32).reshape(N, P)
    if P_pad != P:
        logits = jnp.pad(logits, ((0, 0), (0, 0), (0, P_pad - P)))
        tgt = jnp.pad(tgt, ((0, 0), (0, P_pad - P)), constant_values=-1)
    logits = logits.reshape(N, C, R, _LANE)
    tgt = tgt.reshape(N, R, _LANE)

    sublane = {1: 32, 2: 16}.get(pred.dtype.itemsize, 8)
    vmem_limit = min(_vmem_capacity_bytes() * 3 // 4, 96 * 1024 * 1024)
    tile_r = _pick_tile_r(C, R, pred.dtype.itemsize, vmem_limit // 3, sublane)
    grid = (N, pl.cdiv(R, tile_r))

    kernel = _make_ce_dice_kernel(C, P)

    cost = pl.CostEstimate(
        flops=int(12 * N * C * P),
        transcendentals=int((C + 2) * N * P),
        bytes_accessed=int(logits.size * logits.dtype.itemsize
                           + tgt.size * 4 + 4 * N * (3 * C + 1)),
    )

    ce_part, inter, prob, cnt = pl.pallas_call(
        kernel,
        out_shape=(
            jax.ShapeDtypeStruct((N, 1, 1), jnp.float32),   # CE partial sums
            jax.ShapeDtypeStruct((N, C, 1), jnp.float32),   # intersection
            jax.ShapeDtypeStruct((N, C, 1), jnp.float32),   # softmax sum
            jax.ShapeDtypeStruct((N, C, 1), jnp.float32),   # one-hot count
        ),
        grid=grid,
        in_specs=[
            pl.BlockSpec((1, C, tile_r, _LANE), lambda n, r: (n, 0, r, 0)),
            pl.BlockSpec((1, tile_r, _LANE), lambda n, r: (n, r, 0)),
        ],
        out_specs=(
            pl.BlockSpec((1, 1, 1), lambda n, r: (n, 0, 0)),
            pl.BlockSpec((1, C, 1), lambda n, r: (n, 0, 0)),
            pl.BlockSpec((1, C, 1), lambda n, r: (n, 0, 0)),
            pl.BlockSpec((1, C, 1), lambda n, r: (n, 0, 0)),
        ),
        compiler_params=pltpu.CompilerParams(
            dimension_semantics=("parallel", "arbitrary"),
            vmem_limit_bytes=vmem_limit,
        ),
        cost_estimate=cost,
    )(logits, tgt)

    # Tiny plain-JAX epilogue (dice formula + means), per the v7x restructure.
    ce_mean = jnp.sum(ce_part) / float(N * P)
    inter2 = inter.reshape(N, C)
    union = prob.reshape(N, C) + cnt.reshape(N, C)
    dice = 1.0 - (2.0 * inter2 + 1.0) / (union + 1.0)
    return ce_mean + jnp.mean(dice)


def _nearest_downsample(target, out_h, out_w):
    """F.interpolate(mode='nearest') with exact integer inverse scale factors
    (0.25 / 0.5 here) is a strided slice."""
    _, H, W = target.shape
    sh, sw = H // out_h, W // out_w
    assert sh * out_h == H and sw * out_w == W, (
        "nearest downsample requires integer inverse scale factors")
    return target[:, ::sh, ::sw]


def ce_dice_loss_with_ds(outputs, target):
    """Forward of CEDiceLossWithDS (weight=None, reduction='mean', smooth=1.0).

    outputs = (final_out [N,C,H,W], ds1_out [N,C,H/4,W/4], ds2_out [N,C,H/2,W/2])
    target  = [N, H, W] integer class labels.
    """
    final_out, ds1_out, ds2_out = outputs

    loss_final = _ce_dice_loss(final_out, target)

    target_ds1 = _nearest_downsample(target, ds1_out.shape[2], ds1_out.shape[3])
    target_ds2 = _nearest_downsample(target, ds2_out.shape[2], ds2_out.shape[3])

    loss_ds1 = _ce_dice_loss(ds1_out, target_ds1)
    loss_ds2 = _ce_dice_loss(ds2_out, target_ds2)

    return loss_final + 0.5 * loss_ds1 + 0.3 * loss_ds2


if __name__ == "__main__":
    N, C, H, W = 2, 4, 16, 16
    key = jax.random.PRNGKey(0)
    k1, k2, k3, k4 = jax.random.split(key, 4)

    final_out = jax.random.normal(k1, (N, C, H, W), dtype=jnp.float32)
    ds1_out = jax.random.normal(k2, (N, C, H // 4, W // 4), dtype=jnp.float32)
    ds2_out = jax.random.normal(k3, (N, C, H // 2, W // 2), dtype=jnp.float32)
    target = jax.random.randint(k4, (N, H, W), 0, C, dtype=jnp.int32)

    loss = ce_dice_loss_with_ds((final_out, ds1_out, ds2_out), target)
    jax.block_until_ready(loss)
    print("KERNEL_OK")
</pallas_src>

<mosaic_0001>
module attributes {stable_mosaic.version = 11 : i64} {
  func.func @kernel(%arg0: i32, %arg1: i32, %arg2: memref<1x4x2x128xf32, #tpu.memory_space<vmem>>, %arg3: memref<1x2x128xi32, #tpu.memory_space<vmem>>, %arg4: memref<1x1x1xf32, #tpu.memory_space<vmem>>, %arg5: memref<1x4x1xf32, #tpu.memory_space<vmem>>, %arg6: memref<1x4x1xf32, #tpu.memory_space<vmem>>, %arg7: memref<1x4x1xf32, #tpu.memory_space<vmem>>) attributes {dimension_semantics = [#tpu.dimension_semantics<parallel>, #tpu.dimension_semantics<arbitrary>], iteration_bounds = array<i64: 2, 1>, scalar_prefetch = 0 : i64, scratch_operands = 0 : i64, tpu.core_type = #tpu.core_type<tc>, window_params = [{transform_indices = @transform_0, window_bounds = array<i64: 1, 4, 2, 128>}, {transform_indices = @transform_1, window_bounds = array<i64: 1, 2, 128>}, {transform_indices = @transform_2, window_bounds = array<i64: 1, 1, 1>}, {transform_indices = @transform_3, window_bounds = array<i64: 1, 4, 1>}, {transform_indices = @transform_4, window_bounds = array<i64: 1, 4, 1>}, {transform_indices = @transform_5, window_bounds = array<i64: 1, 4, 1>}]} {
    %c0_i32 = arith.constant 0 : i32
    %0 = arith.cmpi eq, %arg1, %c0_i32 : i32
    %1 = arith.extui %0 : i1 to i32
    %c0_i32_0 = arith.constant 0 : i32
    %2 = arith.cmpi ne, %1, %c0_i32_0 : i32
    scf.if %2 {
      %cst_46 = arith.constant 0.000000e+00 : f32
      %94 = vector.broadcast %cst_46 : f32 to vector<1x1x1xf32>
      %c0_47 = arith.constant 0 : index
      %c0_48 = arith.constant 0 : index
      %c0_49 = arith.constant 0 : index
      %95 = vector.load %arg4[%c0_47, %c0_48, %c0_49] : memref<1x1x1xf32, #tpu.memory_space<vmem>>, vector<1x1x1xf32>
      tpu.vector_store %arg4[%c0_47, %c0_48, %c0_49], %94 {strides = array<i32>} : memref<1x1x1xf32, #tpu.memory_space<vmem>>, vector<1x1x1xf32>,
      %cst_50 = arith.constant 0.000000e+00 : f32
      %96 = vector.broadcast %cst_50 : f32 to vector<1x4x1xf32>
      %c0_51 = arith.constant 0 : index
      %c0_52 = arith.constant 0 : index
      %c0_53 = arith.constant 0 : index
      %97 = vector.load %arg5[%c0_51, %c0_52, %c0_53] : memref<1x4x1xf32, #tpu.memory_space<vmem>>, vector<1x4x1xf32>
      tpu.vector_store %arg5[%c0_51, %c0_52, %c0_53], %96 {strides = array<i32>} : memref<1x4x1xf32, #tpu.memory_space<vmem>>, vector<1x4x1xf32>,
      %cst_54 = arith.constant 0.000000e+00 : f32
      %98 = vector.broadcast %cst_54 : f32 to vector<1x4x1xf32>
      %c0_55 = arith.constant 0 : index
      %c0_56 = arith.constant 0 : index
      %c0_57 = arith.constant 0 : index
      %99 = vector.load %arg6[%c0_55, %c0_56, %c0_57] : memref<1x4x1xf32, #tpu.memory_space<vmem>>, vector<1x4x1xf32>
      tpu.vector_store %arg6[%c0_55, %c0_56, %c0_57], %98 {strides = array<i32>} : memref<1x4x1xf32, #tpu.memory_space<vmem>>, vector<1x4x1xf32>,
      %cst_58 = arith.constant 0.000000e+00 : f32
      %100 = vector.broadcast %cst_58 : f32 to vector<1x4x1xf32>
      %c0_59 = arith.constant 0 : index
      %c0_60 = arith.constant 0 : index
      %c0_61 = arith.constant 0 : index
      %101 = vector.load %arg7[%c0_59, %c0_60, %c0_61] : memref<1x4x1xf32, #tpu.memory_space<vmem>>, vector<1x4x1xf32>
      tpu.vector_store %arg7[%c0_59, %c0_60, %c0_61], %100 {strides = array<i32>} : memref<1x4x1xf32, #tpu.memory_space<vmem>>, vector<1x4x1xf32>,
    } else {
    }
    %c0 = arith.constant 0 : index
    %c0_1 = arith.constant 0 : index
    %c0_2 = arith.constant 0 : index
    %3 = vector.load %arg3[%c0, %c0_1, %c0_2] : memref<1x2x128xi32, #tpu.memory_space<vmem>>, vector<1x2x128xi32>
    %4 = vector.shape_cast %3 : vector<1x2x128xi32> to vector<2x128xi32>
    %5 = tpu.iota {dimensions = array<i32: 0>} : vector<2x128xi32>
    %6 = tpu.iota {dimensions = array<i32: 1>} : vector<2x128xi32>
    %c2_i32 = arith.constant 2 : i32
    %7 = arith.muli %arg1, %c2_i32 : i32
    %8 = vector.broadcast %7 : i32 to vector<2x128xi32>
    %9 = arith.addi %8, %5 : vector<2x128xi32>
    %c128_i32 = arith.constant 128 : i32
    %10 = vector.broadcast %c128_i32 : i32 to vector<2x128xi32>
    %11 = arith.muli %9, %10 : vector<2x128xi32>
    %12 = arith.addi %11, %6 : vector<2x128xi32>
    %c256_i32 = arith.constant 256 : i32
    %13 = vector.broadcast %c256_i32 : i32 to vector<2x128xi32>
    %14 = arith.cmpi slt, %12, %13 : vector<2x128xi32>
    %c0_i32_3 = arith.constant 0 : i32
    %15 = vector.broadcast %c0_i32_3 : i32 to vector<2x128xi32>
    %16 = arith.cmpi sge, %4, %15 : vector<2x128xi32>
    %c4_i32 = arith.constant 4 : i32
    %17 = vector.broadcast %c4_i32 : i32 to vector<2x128xi32>
    %18 = arith.cmpi slt, %4, %17 : vector<2x128xi32>
    %19 = arith.andi %16, %18 : vector<2x128xi1>
    %20 = arith.andi %14, %19 : vector<2x128xi1>
    %c0_4 = arith.constant 0 : index
    %c0_5 = arith.constant 0 : index
    %c0_6 = arith.constant 0 : index
    %c0_7 = arith.constant 0 : index
    %21 = vector.load %arg2[%c0_4, %c0_5, %c0_6, %c0_7] : memref<1x4x2x128xf32, #tpu.memory_space<vmem>>, vector<1x4x2x128xf32>
    %22 = vector.shape_cast %21 : vector<1x4x2x128xf32> to vector<4x2x128xf32>
    %23 = vector.shape_cast %20 : vector<2x128xi1> to vector<1x2x128xi1>
    %cst = arith.constant 0.000000e+00 : f32
    %24 = vector.shape_cast %23 : vector<1x2x128xi1> to vector<1x2x128xi1>
    %25 = vector.broadcast %24 : vector<1x2x128xi1> to vector<4x2x128xi1>
    %26 = vector.broadcast %cst : f32 to vector<4x2x128xf32>
    %27 = arith.select %25, %22, %26 : vector<4x2x128xi1>, vector<4x2x128xf32>
    %cst_8 = arith.constant dense<0xFF800000> : vector<2x128xf32>
    %28 = vector.multi_reduction <maximumf>, %27, %cst_8 [0] : vector<4x2x128xf32> to vector<2x128xf32>
    %29 = vector.shape_cast %28 : vector<2x128xf32> to vector<1x2x128xf32>
    %30 = vector.broadcast %29 : vector<1x2x128xf32> to vector<4x2x128xf32>
    %31 = arith.subf %27, %30 : vector<4x2x128xf32>
    %32 = math.exp %31 : vector<4x2x128xf32>
    %cst_9 = arith.constant dense<0.000000e+00> : vector<2x128xf32>
    %33 = vector.multi_reduction <add>, %32, %cst_9 [0] : vector<4x2x128xf32> to vector<2x128xf32>
    %34 = tpu.reciprocal %33 {approx = true} : vector<2x128xf32> -> vector<2x128xf32>
    %35 = arith.mulf %33, %34 : vector<2x128xf32>
    %cst_10 = arith.constant 2.000000e+00 : f32
    %36 = vector.broadcast %cst_10 : f32 to vector<2x128xf32>
    %37 = arith.subf %36, %35 : vector<2x128xf32>
    %38 = arith.mulf %34, %37 : vector<2x128xf32>
    %39 = tpu.iota {dimensions = array<i32: 0>} : vector<4x2x128xi32>
    %40 = vector.shape_cast %4 : vector<2x128xi32> to vector<1x2x128xi32>
    %41 = vector.broadcast %40 : vector<1x2x128xi32> to vector<4x2x128xi32>
    %42 = arith.cmpi eq, %39, %41 : vector<4x2x128xi32>
    %43 = vector.shape_cast %20 : vector<2x128xi1> to vector<1x2x128xi1>
    %44 = vector.broadcast %43 : vector<1x2x128xi1> to vector<4x2x128xi1>
    %45 = arith.andi %42, %44 : vector<4x2x128xi1>
    %cst_11 = arith.constant 0.000000e+00 : f32
    %46 = vector.broadcast %cst_11 : f32 to vector<4x2x128xf32>
    %47 = arith.select %45, %27, %46 : vector<4x2x128xi1>, vector<4x2x128xf32>
    %cst_12 = arith.constant dense<0.000000e+00> : vector<2x128xf32>
    %48 = vector.multi_reduction <add>, %47, %cst_12 [0] : vector<4x2x128xf32> to vector<2x128xf32>
    %49 = math.log %33 : vector<2x128xf32>
    %50 = arith.addf %49, %28 : vector<2x128xf32>
    %51 = arith.subf %50, %48 : vector<2x128xf32>
    %cst_13 = arith.constant 0.000000e+00 : f32
    %52 = vector.broadcast %cst_13 : f32 to vector<2x128xf32>
    %53 = arith.select %20, %51, %52 : vector<2x128xi1>, vector<2x128xf32>
    %c0_14 = arith.constant 0 : index
    %c0_15 = arith.constant 0 : index
    %c0_16 = arith.constant 0 : index
    %54 = vector.load %arg4[%c0_14, %c0_15, %c0_16] : memref<1x1x1xf32, #tpu.memory_space<vmem>>, vector<1x1x1xf32>
    %55 = vector.shape_cast %53 : vector<2x128xf32> to vector<1x2x128xf32>
    %cst_17 = arith.constant dense<0.000000e+00> : vector<1xf32>
    %56 = vector.multi_reduction <add>, %55, %cst_17 [1, 2] : vector<1x2x128xf32> to vector<1xf32>
    %57 = vector.shape_cast %56 : vector<1xf32> to vector<1x1x1xf32>
    %58 = vector.extract %57[0, 0, 0] : f32 from vector<1x1x1xf32>
    %59 = vector.broadcast %58 : f32 to vector<1x1xf32>
    %60 = vector.shape_cast %59 : vector<1x1xf32> to vector<1x1x1xf32>
    %61 = arith.addf %54, %60 : vector<1x1x1xf32>
    %c0_18 = arith.constant 0 : index
    %c0_19 = arith.constant 0 : index
    %c0_20 = arith.constant 0 : index
    %62 = vector.load %arg4[%c0_18, %c0_19, %c0_20] : memref<1x1x1xf32, #tpu.memory_space<vmem>>, vector<1x1x1xf32>
    tpu.vector_store %arg4[%c0_18, %c0_19, %c0_20], %61 {strides = array<i32>} : memref<1x1x1xf32, #tpu.memory_space<vmem>>, vector<1x1x1xf32>,
    %63 = arith.extui %20 : vector<2x128xi1> to vector<2x128xi32>
    %64 = arith.sitofp %63 : vector<2x128xi32> to vector<2x128xf32>
    %65 = arith.mulf %38, %64 : vector<2x128xf32>
    %66 = vector.shape_cast %65 : vector<2x128xf32> to vector<1x2x128xf32>
    %67 = vector.broadcast %66 : vector<1x2x128xf32> to vector<4x2x128xf32>
    %68 = arith.mulf %32, %67 : vector<4x2x128xf32>
    %cst_21 = arith.constant dense<0.000000e+00> : vector<4x2xf32>
    %69 = vector.multi_reduction <add>, %68, %cst_21 [2] : vector<4x2x128xf32> to vector<4x2xf32>
    %cst_22 = arith.constant dense<0.000000e+00> : vector<4xf32>
    %70 = vector.multi_reduction <add>, %69, %cst_22 [1] : vector<4x2xf32> to vector<4xf32>
    %71 = vector.shape_cast %70 : vector<4xf32> to vector<4x1xf32>
    %cst_23 = arith.constant 0.000000e+00 : f32
    %72 = vector.broadcast %cst_23 : f32 to vector<4x2x128xf32>
    %73 = arith.select %45, %68, %72 : vector<4x2x128xi1>, vector<4x2x128xf32>
    %cst_24 = arith.constant dense<0.000000e+00> : vector<4x2xf32>
    %74 = vector.multi_reduction <add>, %73, %cst_24 [2] : vector<4x2x128xf32> to vector<4x2xf32>
    %cst_25 = arith.constant dense<0.000000e+00> : vector<4xf32>
    %75 = vector.multi_reduction <add>, %74, %cst_25 [1] : vector<4x2xf32> to vector<4xf32>
    %76 = vector.shape_cast %75 : vector<4xf32> to vector<4x1xf32>
    %77 = arith.extui %45 : vector<4x2x128xi1> to vector<4x2x128xi32>
    %78 = arith.sitofp %77 : vector<4x2x128xi32> to vector<4x2x128xf32>
    %cst_26 = arith.constant dense<0.000000e+00> : vector<4x2xf32>
    %79 = vector.multi_reduction <add>, %78, %cst_26 [2] : vector<4x2x128xf32> to vector<4x2xf32>
    %cst_27 = arith.constant dense<0.000000e+00> : vector<4xf32>
    %80 = vector.multi_reduction <add>, %79, %cst_27 [1] : vector<4x2xf32> to vector<4xf32>
    %81 = vector.shape_cast %80 : vector<4xf32> to vector<4x1xf32>
    %c0_28 = arith.constant 0 : index
    %c0_29 = arith.constant 0 : index
    %c0_30 = arith.constant 0 : index
    %82 = vector.load %arg6[%c0_28, %c0_29, %c0_30] : memref<1x4x1xf32, #tpu.memory_space<vmem>>, vector<1x4x1xf32>
    %83 = vector.shape_cast %71 : vector<4x1xf32> to vector<1x4x1xf32>
    %84 = arith.addf %82, %83 : vector<1x4x1xf32>
    %c0_31 = arith.constant 0 : index
    %c0_32 = arith.constant 0 : index
    %c0_33 = arith.constant 0 : index
    %85 = vector.load %arg6[%c0_31, %c0_32, %c0_33] : memref<1x4x1xf32, #tpu.memory_space<vmem>>, vector<1x4x1xf32>
    tpu.vector_store %arg6[%c0_31, %c0_32, %c0_33], %84 {strides = array<i32>} : memref<1x4x1xf32, #tpu.memory_space<vmem>>, vector<1x4x1xf32>,
    %c0_34 = arith.constant 0 : index
    %c0_35 = arith.constant 0 : index
    %c0_36 = arith.constant 0 : index
    %86 = vector.load %arg5[%c0_34, %c0_35, %c0_36] : memref<1x4x1xf32, #tpu.memory_space<vmem>>, vector<1x4x1xf32>
    %87 = vector.shape_cast %76 : vector<4x1xf32> to vector<1x4x1xf32>
    %88 = arith.addf %86, %87 : vector<1x4x1xf32>
    %c0_37 = arith.constant 0 : index
    %c0_38 = arith.constant 0 : index
    %c0_39 = arith.constant 0 : index
    %89 = vector.load %arg5[%c0_37, %c0_38, %c0_39] : memref<1x4x1xf32, #tpu.memory_space<vmem>>, vector<1x4x1xf32>
    tpu.vector_store %arg5[%c0_37, %c0_38, %c0_39], %88 {strides = array<i32>} : memref<1x4x1xf32, #tpu.memory_space<vmem>>, vector<1x4x1xf32>,
    %c0_40 = arith.constant 0 : index
    %c0_41 = arith.constant 0 : index
    %c0_42 = arith.constant 0 : index
    %90 = vector.load %arg7[%c0_40, %c0_41, %c0_42] : memref<1x4x1xf32, #tpu.memory_space<vmem>>, vector<1x4x1xf32>
    %91 = vector.shape_cast %81 : vector<4x1xf32> to vector<1x4x1xf32>
    %92 = arith.addf %90, %91 : vector<1x4x1xf32>
    %c0_43 = arith.constant 0 : index
    %c0_44 = arith.constant 0 : index
    %c0_45 = arith.constant 0 : index
    %93 = vector.load %arg7[%c0_43, %c0_44, %c0_45] : memref<1x4x1xf32, #tpu.memory_space<vmem>>, vector<1x4x1xf32>
    tpu.vector_store %arg7[%c0_43, %c0_44, %c0_45], %92 {strides = array<i32>} : memref<1x4x1xf32, #tpu.memory_space<vmem>>, vector<1x4x1xf32>,
    return
  }
  func.func @transform_0(%arg0: i32, %arg1: i32) -> (i32, i32, i32, i32) {
    %c0_i32 = arith.constant 0 : i32
    %c0_i32_0 = arith.constant 0 : i32
    %c0_i32_1 = arith.constant 0 : i32
    return %arg0, %c0_i32, %arg1, %c0_i32_0 : i32, i32, i32, i32
  }
  func.func @transform_1(%arg0: i32, %arg1: i32) -> (i32, i32, i32) {
    %c0_i32 = arith.constant 0 : i32
    %c0_i32_0 = arith.constant 0 : i32
    return %arg0, %arg1, %c0_i32 : i32, i32, i32
  }
  func.func @transform_2(%arg0: i32, %arg1: i32) -> (i32, i32, i32) {
    %c0_i32 = arith.constant 0 : i32
    %c0_i32_0 = arith.constant 0 : i32
    %c0_i32_1 = arith.constant 0 : i32
    return %arg0, %c0_i32, %c0_i32_0 : i32, i32, i32
  }
  func.func @transform_3(%arg0: i32, %arg1: i32) -> (i32, i32, i32) {
    %c0_i32 = arith.constant 0 : i32
    %c0_i32_0 = arith.constant 0 : i32
    %c0_i32_1 = arith.constant 0 : i32
    return %arg0, %c0_i32, %c0_i32_0 : i32, i32, i32
  }
  func.func @transform_4(%arg0: i32, %arg1: i32) -> (i32, i32, i32) {
    %c0_i32 = arith.constant 0 : i32
    %c0_i32_0 = arith.constant 0 : i32
    %c0_i32_1 = arith.constant 0 : i32
    return %arg0, %c0_i32, %c0_i32_0 : i32, i32, i32
  }
  func.func @transform_5(%arg0: i32, %arg1: i32) -> (i32, i32, i32) {
    %c0_i32 = arith.constant 0 : i32
    %c0_i32_0 = arith.constant 0 : i32
    %c0_i32_1 = arith.constant 0 : i32
    return %arg0, %c0_i32, %c0_i32_0 : i32, i32, i32
  }
}

</mosaic_0001>

<llo_original>
// kernel: tpu_custom_call.1
$region0: #{tpu_custom_call.1}
  #allocation0 [shape = 'u32[]', space=smem, size = 0x4, offset = 0x4, fixed_abs, tag = 'smem constant byte address 0x4 - core index']
  #allocation1 [shape = 'u32[144,128]{1,0:T(1,128)}', space=vmem, size = 0x12000, scoped, tag = 'internal scratch']
  %s0 = inlined_call_operand.hbm [shape: f32[2,4,2,128], index: 0, kind: input, shape index: {}]
  %s1 = inlined_call_operand.hbm [shape: s32[2,2,128], index: 1, kind: input, shape index: {}]
  %s2 = inlined_call_operand.vmem [shape: f32[2,1,1], index: 2, kind: output, shape index: {0}]
  %s3 = inlined_call_operand.vmem [shape: f32[2,4,1], index: 3, kind: output, shape index: {1}]
  %s4 = inlined_call_operand.vmem [shape: f32[2,4,1], index: 4, kind: output, shape index: {2}]
  %s5 = inlined_call_operand.vmem [shape: f32[2,4,1], index: 5, kind: output, shape index: {3}]
  %6 = xla_tuple %s2, %s3, %s4, %s5
  %s7 = sld [smem:[#allocation0]]
  $region77: #{tpu_custom_call.1} parent=0
    _
  %s9 = ssub.s32 1, %s7
  %s10 = scalar_select 0, %s9, %s7
  $region1: #{tpu_custom_call.1} parent=0
    #allocation2 [shape = 'u8[8192]{0}', space=vmem, size = 0x2000, scoped, tag = 'input window, operand 0']
    #allocation3 [shape = 's32[2]{0}', space=sflag, size = 0x8, scoped, tag = 'scoped memory for tpu_custom_call.1']
    #allocation4 [shape = 'u8[2048]{0}', space=vmem, size = 0x800, scoped, tag = 'input window, operand 1']
    #allocation5 [shape = 's32[2]{0}', space=sflag, size = 0x8, scoped, tag = 'scoped memory for tpu_custom_call.1']
    %11 = vsyncpa [#allocation3], 0
    %s12 = scalar_lea.sflag [#allocation3], 1
    %13 = vsyncpa %s12, 0
    %14 = vsyncpa [#allocation5], 0
    %s15 = scalar_lea.sflag [#allocation5], 1
    %16 = vsyncpa %s15, 0
    loop: start=0, step=1, limit=4
    $region2: #{tpu_custom_call.1} parent=1 // loop_pre_header
      _
    $region3: #{tpu_custom_call.1} parent=1 // loop_header
      %s18 = sphi 0, %s22
      %p19 = scmp.ge.s32.totalorder %s18, 4
      %s25 = sphi 0, %s37
      %s26 = sphi 0, %s33
      %s27 = sphi 0, %s25
      %s28 = sphi 0, %s26
      %s29 = sphi 0, %s27
      %s30 = sphi 0, %s28
      %s42 = sphi 0, %s44
      %s45 = sphi 0, %s42
      %s46 = sphi 0, %s45
      %s62 = sphi 0, %s46
      %s70 = sphi 0, %s72
      %s73 = sphi 0, %s70
      %s74 = sphi 0, %s73
      %s90 = sphi 0, %s74
      %s96 = sphi 0, %s98
      %s99 = sphi 0, %s96
      %s100 = sphi 0, %s99
      %s116 = sphi 0, %s100
      %s122 = sphi 0, %s124
      %s125 = sphi 0, %s122
      %s126 = sphi 0, %s125
      %s142 = sphi 0, %s126
      %s148 = sphi 0, %s150
      %s151 = sphi 0, %s148
      %s152 = sphi 0, %s151
      %s168 = sphi 0, %s152
      %s174 = sphi 0, %s176
      %s177 = sphi 0, %s174
      %s178 = sphi 0, %s177
      %s194 = sphi 0, %s178
    $region4: #{tpu_custom_call.1} parent=1 // loop_header_branch
      %21 = sbr.rel (%p19) target = $region8
    $region5: #{tpu_custom_call.1} parent=1 // loop_body
      %s23 = ssub.s32 %s18, 1
      %s24 = ssub.s32 %s18, 2
      %s31 = sadd.s32 1, %s26
      %p32 = scmp.ge.s32.totalorder %s31, 1
      %s33 = scalar_select %p32, 0, %s31
      %s34 = sadd.s32 1, %s25
      %s35 = scalar_select %p32, %s34, %s25
      %p36 = scmp.ge.s32.totalorder %s35, 2
      %s37 = scalar_select %p36, 0, %s35
      %s38 = ssub.s32 %s25, %s37
      %s39 = ssub.s32 %s26, %s33
      %s40 = sor.u32 %s38, %s39
      %p41 = scmp.eq.s32.totalorder %s40, 0
      %s43 = sadd.s32 %s42, 1
      %s44 = scalar_select %p41, %s42, %s43
      %p47 = pneg %p41
      %p48 = scmp.eq.s32.totalorder %s18, 1
      %p49 = por %p47, %p48
      %p50 = scmp.ne.s32.totalorder %s42, %s45
      %p51 = scmp.eq.s32.totalorder %s18, 0
      %p52 = por %p50, %p51
      %p53 = scmp.ne.s32.totalorder %s42, %s45
      %p54 = scmp.eq.s32.totalorder %s23, 1
      %p55 = por %p53, %p54
      %p56 = scmp.ne.s32.totalorder %s45, %s46
      %p57 = scmp.eq.s32.totalorder %s23, 0
      %p58 = por %p56, %p57
      %p59 = scmp.ne.s32.totalorder %s45, %s46
      %p60 = scmp.eq.s32.totalorder %s24, 1
      %p61 = por %p59, %p60
      %p63 = scmp.ne.s32.totalorder %s46, %s62
      %p64 = scmp.eq.s32.totalorder %s24, 0
      %p65 = por %p63, %p64
      %s66 = ssub.s32 %s25, %s37
      %s67 = ssub.s32 %s26, %s33
      %s68 = sor.u32 %s66, %s67
      %p69 = scmp.eq.s32.totalorder %s68, 0
      %s71 = sadd.s32 %s70, 1
      %s72 = scalar_select %p69, %s70, %s71
      %p75 = pneg %p69
      %p76 = scmp.eq.s32.totalorder %s18, 1
      %p77 = por %p75, %p76
      %p78 = scmp.ne.s32.totalorder %s70, %s73
      %p79 = scmp.eq.s32.totalorder %s18, 0
      %p80 = por %p78, %p79
      %p81 = scmp.ne.s32.totalorder %s70, %s73
      %p82 = scmp.eq.s32.totalorder %s23, 1
      %p83 = por %p81, %p82
      %p84 = scmp.ne.s32.totalorder %s73, %s74
      %p85 = scmp.eq.s32.totalorder %s23, 0
      %p86 = por %p84, %p85
      %p87 = scmp.ne.s32.totalorder %s73, %s74
      %p88 = scmp.eq.s32.totalorder %s24, 1
      %p89 = por %p87, %p88
      %p91 = scmp.ne.s32.totalorder %s74, %s90
      %p92 = scmp.eq.s32.totalorder %s24, 0
      %p93 = por %p91, %p92
      %s94 = ssub.s32 %s25, %s37
      %p95 = scmp.eq.s32.totalorder %s94, 0
      %s97 = sadd.s32 %s96, 1
      %s98 = scalar_select %p95, %s96, %s97
      %p101 = pneg %p95
      %p102 = scmp.eq.s32.totalorder %s18, 1
      %p103 = por %p101, %p102
      %p104 = scmp.ne.s32.totalorder %s96, %s99
      %p105 = scmp.eq.s32.totalorder %s18, 0
      %p106 = por %p104, %p105
      %p107 = scmp.ne.s32.totalorder %s96, %s99
      %p108 = scmp.eq.s32.totalorder %s23, 1
      %p109 = por %p107, %p108
      %p110 = scmp.ne.s32.totalorder %s99, %s100
      %p111 = scmp.eq.s32.totalorder %s23, 0
      %p112 = por %p110, %p111
      %p113 = scmp.ne.s32.totalorder %s99, %s100
      %p114 = scmp.eq.s32.totalorder %s24, 1
      %p115 = por %p113, %p114
      %p117 = scmp.ne.s32.totalorder %s100, %s116
      %p118 = scmp.eq.s32.totalorder %s24, 0
      %p119 = por %p117, %p118
      %s120 = ssub.s32 %s25, %s37
      %p121 = scmp.eq.s32.totalorder %s120, 0
      %s123 = sadd.s32 %s122, 1
      %s124 = scalar_select %p121, %s122, %s123
      %p127 = pneg %p121
      %p128 = scmp.eq.s32.totalorder %s18, 1
      %p129 = por %p127, %p128
      %p130 = scmp.ne.s32.totalorder %s122, %s125
      %p131 = scmp.eq.s32.totalorder %s18, 0
      %p132 = por %p130, %p131
      %p133 = scmp.ne.s32.totalorder %s122, %s125
      %p134 = scmp.eq.s32.totalorder %s23, 1
      %p135 = por %p133, %p134
      %p136 = scmp.ne.s32.totalorder %s125, %s126
      %p137 = scmp.eq.s32.totalorder %s23, 0
      %p138 = por %p136, %p137
      %p139 = scmp.ne.s32.totalorder %s125, %s126
      %p140 = scmp.eq.s32.totalorder %s24, 1
      %p141 = por %p139, %p140
      %p143 = scmp.ne.s32.totalorder %s126, %s142
      %p144 = scmp.eq.s32.totalorder %s24, 0
      %p145 = por %p143, %p144
      %s146 = ssub.s32 %s25, %s37
      %p147 = scmp.eq.s32.totalorder %s146, 0
      %s149 = sadd.s32 %s148, 1
      %s150 = scalar_select %p147, %s148, %s149
      %p153 = pneg %p147
      %p154 = scmp.eq.s32.totalorder %s18, 1
      %p155 = por %p153, %p154
      %p156 = scmp.ne.s32.totalorder %s148, %s151
      %p157 = scmp.eq.s32.totalorder %s18, 0
      %p158 = por %p156, %p157
      %p159 = scmp.ne.s32.totalorder %s148, %s151
      %p160 = scmp.eq.s32.totalorder %s23, 1
      %p161 = por %p159, %p160
      %p162 = scmp.ne.s32.totalorder %s151, %s152
      %p163 = scmp.eq.s32.totalorder %s23, 0
      %p164 = por %p162, %p163
      %p165 = scmp.ne.s32.totalorder %s151, %s152
      %p166 = scmp.eq.s32.totalorder %s24, 1
      %p167 = por %p165, %p166
      %p169 = scmp.ne.s32.totalorder %s152, %s168
      %p170 = scmp.eq.s32.totalorder %s24, 0
      %p171 = por %p169, %p170
      %s172 = ssub.s32 %s25, %s37
      %p173 = scmp.eq.s32.totalorder %s172, 0
      %s175 = sadd.s32 %s174, 1
      %s176 = scalar_select %p173, %s174, %s175
      %p179 = pneg %p173
      %p180 = scmp.eq.s32.totalorder %s18, 1
      %p181 = por %p179, %p180
      %p182 = scmp.ne.s32.totalorder %s174, %s177
      %p183 = scmp.eq.s32.totalorder %s18, 0
      %p184 = por %p182, %p183
      %p185 = scmp.ne.s32.totalorder %s174, %s177
      %p186 = scmp.eq.s32.totalorder %s23, 1
      %p187 = por %p185, %p186
      %p188 = scmp.ne.s32.totalorder %s177, %s178
      %p189 = scmp.eq.s32.totalorder %s23, 0
      %p190 = por %p188, %p189
      %p191 = scmp.ne.s32.totalorder %s177, %s178
      %p192 = scmp.eq.s32.totalorder %s24, 1
      %p193 = por %p191, %p192
      %p195 = scmp.ne.s32.totalorder %s178, %s194
      %p196 = scmp.eq.s32.totalorder %s24, 0
      %p197 = por %p195, %p196
      %p198 = scmp.le.s32.totalorder 1, %s18
      %p199 = scmp.lt.s32.totalorder %s18, 3
      %p200 = pnand %p198, %p199
      %p201 = pneg %p200
      // Predicated region
      $region9: #{tpu_custom_call.1} parent=5 // pred_check
        _
      $region10: #{tpu_custom_call.1} parent=5 // pred_check_branch
        %203 = sbr.rel (%p200) target = $region12
      $region11: #{tpu_custom_call.1} parent=5 // pred_region
        %s204 = ssub.s32 %s18, 1
      $region12: #{tpu_custom_call.1} parent=5 // pred_fallthru
        _
      %p205 = scmp.lt.s32.totalorder %s18, 2
      // Predicated region
      $region13: #{tpu_custom_call.1} parent=5 // pred_check
        %p206 = pneg %p205
      $region14: #{tpu_custom_call.1} parent=5 // pred_check_branch
        %208 = sbr.rel (%p206) target = $region16
      $region15: #{tpu_custom_call.1} parent=5 // pred_region
        // Predicated region
        $region17: #{tpu_custom_call.1} parent=15 // pred_check
          %p209 = pneg %p52
        $region18: #{tpu_custom_call.1} parent=15 // pred_check_branch
          %211 = sbr.rel (%p209) target = $region20
        $region19: #{tpu_custom_call.1} parent=15 // pred_region
          %s212 = sand.u32 %s42, 1
          %s213 = scalar_lea.sflag [#allocation3], %s212
          %s214 = sand.u32 %s42, 1
          %s215 = smul.addr %s214, 8
          %s216 = scalar_lea.vmem [#allocation2], %s215
          %s218 = ssub.s32 128, 128
          %219 = vsyncadd %s213, %s218
          %s220 = smul.addr %s25, 4
          %s221 = sadd.s32 %s26, %s220
          %s222 = smul.addr %s221, 32
          %s223 = scalar_lea.hbm %s0, %s222
          %s224 = sshll.u32 %s216, 4
          %s225 = int_to_ptr.vmem [resolvable:$true] %s224
          %230 = dma.hbm_to_vmem [thread:$0]  %s223, 128, %s225, %s213, 32, 32, 2
        $region20: #{tpu_custom_call.1} parent=15 // pred_fallthru
          _
        // Predicated region
        $region21: #{tpu_custom_call.1} parent=15 // pred_check
          %p231 = pneg %p80
        $region22: #{tpu_custom_call.1} parent=15 // pred_check_branch
          %233 = sbr.rel (%p231) target = $region24
        $region23: #{tpu_custom_call.1} parent=15 // pred_region
          %s234 = sand.u32 %s70, 1
          %s235 = scalar_lea.sflag [#allocation5], %s234
          %s236 = sand.u32 %s70, 1
          %s237 = smul.addr %s236, 2
          %s238 = scalar_lea.vmem [#allocation4], %s237
          %s240 = ssub.s32 32, 32
          %241 = vsyncadd %s235, %s240
          %s242 = sadd.s32 %s26, %s25
          %s243 = smul.addr %s242, 32
          %s244 = scalar_lea.hbm %s1, %s243
          %s246 = sshll.u32 %s238, 4
          %s247 = int_to_ptr.vmem [resolvable:$true] %s246
          %249 = dma.hbm_to_vmem [thread:$0]  %s244, 32, %s247, %s235
        $region24: #{tpu_custom_call.1} parent=15 // pred_fallthru
          _
      $region16: #{tpu_custom_call.1} parent=5 // pred_fallthru
        _
      %p250 = scmp.le.s32.totalorder 1, %s18
      %p251 = scmp.lt.s32.totalorder %s18, 3
      %p252 = pnand %p250, %p251
      %p253 = pneg %p252
      // Predicated region
      $region25: #{tpu_custom_call.1} parent=5 // pred_check
        _
      $region26: #{tpu_custom_call.1} parent=5 // pred_check_branch
        %255 = sbr.rel (%p252) target = $region28
      $region27: #{tpu_custom_call.1} parent=5 // pred_region
        %s256 = ssub.s32 %s18, 1
        %s257 = sand.u32 %s45, 1
        %s258 = scalar_lea.sflag [#allocation3], %s257
        %s259 = sand.u32 %s45, 1
        %s260 = smul.addr %s259, 8
        %s261 = scalar_lea.vmem [#allocation2], %s260
        // Predicated region
        $region29: #{tpu_custom_call.1} parent=27 // pred_check
          %p262 = pneg %p58
        $region30: #{tpu_custom_call.1} parent=27 // pred_check_branch
          %264 = sbr.rel (%p262) target = $region32
        $region31: #{tpu_custom_call.1} parent=27 // pred_region
          %265 = dma.done %s258, 128
        $region32: #{tpu_custom_call.1} parent=27 // pred_fallthru
          _
        %s266 = sand.u32 %s73, 1
        %s267 = scalar_lea.sflag [#allocation5], %s266
        %s268 = sand.u32 %s73, 1
        %s269 = smul.addr %s268, 2
        %s270 = scalar_lea.vmem [#allocation4], %s269
        // Predicated region
        $region33: #{tpu_custom_call.1} parent=27 // pred_check
          %p271 = pneg %p86
        $region34: #{tpu_custom_call.1} parent=27 // pred_check_branch
          %273 = sbr.rel (%p271) target = $region36
        $region35: #{tpu_custom_call.1} parent=27 // pred_region
          %274 = dma.done %s267, 32
        $region36: #{tpu_custom_call.1} parent=27 // pred_fallthru
          _
        %s275 = sand.u32 %s45, 1
        %s276 = scalar_lea.sflag [#allocation3], %s275
        %s277 = sand.u32 %s45, 1
        %s278 = smul.addr %s277, 8
        %s279 = scalar_lea.vmem [#allocation2], %s278
        %p280 = pneg %p58
        %p281 = pneg %p55
        %s282 = sand.u32 %s73, 1
        %s283 = scalar_lea.sflag [#allocation5], %s282
        %s284 = sand.u32 %s73, 1
        %s285 = smul.addr %s284, 2
        %s286 = scalar_lea.vmem [#allocation4], %s285
        %p287 = pneg %p86
        %p288 = pneg %p83
        %p289 = pneg %p112
        %p290 = pneg %p109
        %p291 = scmp.lt.s32.totalorder %s27, 1
        %s292 = scalar_select %p291, %s27, 1
        %s293 = scalar_lea.vmem %s2, %s292
        %p294 = pneg %p138
        %p295 = pneg %p135
        %p296 = scmp.lt.s32.totalorder %s27, 1
        %s297 = scalar_select %p296, %s27, 1
        %s298 = smul.addr %s297, 4
        %s299 = scalar_lea.vmem %s3, %s298
        %p300 = pneg %p164
        %p301 = pneg %p161
        %p302 = scmp.lt.s32.totalorder %s27, 1
        %s303 = scalar_select %p302, %s27, 1
        %s304 = smul.addr %s303, 4
        %s305 = scalar_lea.vmem %s4, %s304
        %p306 = pneg %p190
        %p307 = pneg %p187
        %p308 = scmp.lt.s32.totalorder %s27, 1
        %s309 = scalar_select %p308, %s27, 1
        %s310 = smul.addr %s309, 4
        %s311 = scalar_lea.vmem %s5, %s310
        %p312 = scmp.lt.s32.totalorder %s27, 1
        %s313 = scalar_select %p312, %s27, 1
        %s314 = scalar_lea.vmem %s2, %s313
        %p315 = scmp.lt.s32.totalorder %s27, 1
        %s316 = scalar_select %p315, %s27, 1
        %s317 = smul.addr %s316, 4
        %s318 = scalar_lea.vmem %s3, %s317
        %p319 = scmp.lt.s32.totalorder %s27, 1
        %s320 = scalar_select %p319, %s27, 1
        %s321 = smul.addr %s320, 4
        %s322 = scalar_lea.vmem %s4, %s321
        %p323 = scmp.lt.s32.totalorder %s27, 1
        %s324 = scalar_select %p323, %s27, 1
        %s325 = smul.addr %s324, 4
        %s326 = scalar_lea.vmem %s5, %s325
        %p327 = scmp.eq.s32.totalorder %s28, 0
        // Predicated region
        $region37: #{tpu_custom_call.1} parent=27 // pred_check
          %p328 = pneg %p327
        $region38: #{tpu_custom_call.1} parent=27 // pred_check_branch
          %330 = sbr.rel (%p328) target = $region40
        $region39: #{tpu_custom_call.1} parent=27 // pred_region
          %vm331 = vcmask 0
          %332 = vst.msk [vmem:[%s314] sm:$0x1] %vm331, 0.0
          %vm333 = vcmask 3072
          %334 = vst.msk [vmem:[%s318] sm:$0xf] %vm333, 0.0
          %335 = vst.msk [vmem:[%s322] sm:$0xf] %vm333, 0.0
          %336 = vst.msk [vmem:[%s326] sm:$0xf] %vm333, 0.0
        $region40: #{tpu_custom_call.1} parent=27 // pred_fallthru
          _
        %v337 = vld [vmem:[%s270] sm:$0x3]
        %v338 = vlaneseq
        %v339 = vshrl.u32 %v338, 7
        %v340 = vlaneseq
        %v341 = vand.u32 %v340, 127
        %s342 = smul.u32 %s28, 2
        %v343 = vstv %s342
        %v344 = vadd.s32 %v343, %v339
        %v345 = vmul.u32 %v344, 128
        %v346 = vadd.s32 %v345, %v341
        %vm347 = vcmp.lt.s32.totalorder %v346, 256
        %vm348 = vcmp.ge.s32.totalorder %v337, 0
        %vm349 = vcmp.lt.s32.totalorder %v337, 4
        %vm350 = vmand %vm348, %vm349
        %vm351 = vmand %vm347, %vm350
        %v352 = vld [vmem:[%s261] sm:$0x3]
        %v353 = vld [vmem:[%s261 + $0x2] sm:$0x3]
        %v354 = vld [vmem:[%s261 + $0x4] sm:$0x3]
        %v355 = vld [vmem:[%s261 + $0x6] sm:$0x3]
        %v356 = vsel %vm351, 1, 0
        %vm357 = vcmp.eq.s32.totalorder %v356, 1
        %v358 = vsel %vm357, %v352, 0.0
        %v359 = vsel %vm357, %v353, 0.0
        %v360 = vsel %vm357, %v354, 0.0
        %v361 = vsel %vm357, %v355, 0.0
        %vm362 = vcmask 1041408
        %v363 = vsel %vm362, %v358, -inf
        %v364 = vsel %vm362, %v359, -inf
        %v365 = vsel %vm362, %v360, -inf
        %v366 = vsel %vm362, %v361, -inf
        %v367 = vmax.f32 %v363, %v364
        %v368 = vmax.f32 %v365, %v366
        %v369 = vmax.f32 %v367, %v368
        %v370 = vsub.f32 %v358, %v369
        %v371 = vsub.f32 %v359, %v369
        %v372 = vsub.f32 %v360, %v369
        %v373 = vsub.f32 %v361, %v369
        %v374 = vmul.f32 %v370, 1.442695
        %v375 = vpow.pop %v374
        %v376 = vmul.f32 %v371, 1.442695
        %v377 = vpow.pop %v376
        %v378 = vmul.f32 %v372, 1.442695
        %v379 = vpow.pop %v378
        %v380 = vmul.f32 %v373, 1.442695
        %v381 = vpow.pop %v380
        %v382 = vsel %vm362, %v375, 0.0
        %v383 = vsel %vm362, %v377, 0.0
        %v384 = vadd.f32 %v382, %v383
        %v385 = vsel %vm362, %v379, 0.0
        %v386 = vadd.f32 %v384, %v385
        %v387 = vsel %vm362, %v381, 0.0
        %v388 = vadd.f32 %v386, %v387
        %v389 = vrcp.pop %v388
        %v390 = vmul.f32 %v388, %v389
        %v391 = vsub.f32 2.0, %v390
        %v392 = vmul.f32 %v389, %v391
        %vm393 = vcmp.eq.s32.totalorder %v337, 0
        %vm394 = vcmp.eq.s32.totalorder %v337, 1
        %vm395 = vcmp.eq.s32.totalorder %v337, 2
        %vm396 = vcmp.eq.s32.totalorder %v337, 3
        %vm397 = vmand %vm393, %vm357
        %vm398 = vmand %vm394, %vm357
        %vm399 = vmand %vm395, %vm357
        %vm400 = vmand %vm396, %vm357
        %v401 = vsel %vm397, %v358, 0.0
        %v402 = vsel %vm398, %v359, 0.0
        %v403 = vsel %vm399, %v360, 0.0
        %v404 = vsel %vm400, %v361, 0.0
        %v405 = vsel %vm362, %v401, 0.0
        %v406 = vsel %vm362, %v402, 0.0
        %v407 = vadd.f32 %v405, %v406
        %v408 = vsel %vm362, %v403, 0.0
        %v409 = vadd.f32 %v407, %v408
        %v410 = vsel %vm362, %v404, 0.0
        %v411 = vadd.f32 %v409, %v410
        %v412 = vlog2.pop %v388
        %v413 = vmul.f32 %v412, 0.6931472
        %v414 = vadd.f32 %v413, %v369
        %v415 = vsub.f32 %v414, %v411
        %v416 = vsel %vm351, %v415, 0.0
        %v417 = vld [vmem:[%s314] sm:$0x1]
        %v418 = vsel %vm362, %v416, 0.0
        %419 = vadd.xlane.f32.xlu0 %v418
        %v420 = vpop.xlane.xlu0 %419
        %v421 = vrot.slane %v420, 4
        %v422 = vadd.f32 %v420, %v421
        %v423 = vrot.slane %v422, 2
        %v424 = vadd.f32 %v422, %v423
        %v425 = vrot.slane %v424, 1
        %v426 = vadd.f32 %v424, %v425
        %s427 = vtos %v426
        %v428 = vstv %s427
        %v429 = vadd.f32 %v417, %v428
        %vm430 = vcmask 0
        %431 = vst.msk [vmem:[%s314] sm:$0x1] %vm430, %v429
        %v432 = vcvt.s32.f32 %v356
        %v433 = vmul.f32 %v392, %v432
        %v434 = vmul.f32 %v375, %v433
        %v435 = vmul.f32 %v377, %v433
        %v436 = vmul.f32 %v379, %v433
        %v437 = vmul.f32 %v381, %v433
        %v438 = vsel %vm362, %v434, 0.0
        %439 = vadd.xlane.f32.xlu0 %v438
        %v440 = vpop.xlane.xlu0 %439
        %v441 = vsel %vm362, %v435, 0.0
        %442 = vadd.xlane.f32.xlu0 %v441
        %v443 = vpop.xlane.xlu0 %442
        %v444 = vsel %vm362, %v436, 0.0
        %445 = vadd.xlane.f32.xlu0 %v444
        %v446 = vpop.xlane.xlu0 %445
        %v447 = vsel %vm362, %v437, 0.0
        %448 = vadd.xlane.f32.xlu0 %v447
        %v449 = vpop.xlane.xlu0 %448
        %v454 = vlaneseq
        %v455 = vshrl.u32 %v454, 7
        %v456 = vsub.s32 %v341, %v455
        %v457 = vrot.slane %v440, %v456
        %v458 = vlaneseq
        %v459 = vshrl.u32 %v458, 7
        %v460 = vsub.s32 %v341, %v459
        %v461 = vrot.slane %v443, %v460
        %v462 = vlaneseq
        %v463 = vshrl.u32 %v462, 7
        %v464 = vsub.s32 %v341, %v463
        %v465 = vrot.slane %v446, %v464
        %v466 = vlaneseq
        %v467 = vshrl.u32 %v466, 7
        %v468 = vsub.s32 %v341, %v467
        %v469 = vrot.slane %v449, %v468
        %vm470 = vcmask 1041409
        %v471 = vsel %vm470, %v461, %v457
        %vm472 = vcmask 1042434
        %v473 = vsel %vm472, %v465, %v471
        %vm474 = vcmask 1043459
        %v475 = vsel %vm474, %v469, %v473
        %vm477 = vcmask 11264
        %v478 = vsel %vm477, %v475, 0.0
        %479 = vadd.xlane.f32.xlu0 %v478
        %v480 = vpop.xlane.xlu0 %479
        %v481 = vsel %vm397, %v434, 0.0
        %v482 = vsel %vm398, %v435, 0.0
        %v483 = vsel %vm399, %v436, 0.0
        %v484 = vsel %vm400, %v437, 0.0
        %v485 = vsel %vm362, %v481, 0.0
        %486 = vadd.xlane.f32.xlu0 %v485
        %v487 = vpop.xlane.xlu0 %486
        %v488 = vsel %vm362, %v482, 0.0
        %489 = vadd.xlane.f32.xlu0 %v488
        %v490 = vpop.xlane.xlu0 %489
        %v491 = vsel %vm362, %v483, 0.0
        %492 = vadd.xlane.f32.xlu0 %v491
        %v493 = vpop.xlane.xlu0 %492
        %v494 = vsel %vm362, %v484, 0.0
        %495 = vadd.xlane.f32.xlu0 %v494
        %v496 = vpop.xlane.xlu0 %495
        %v501 = vlaneseq
        %v502 = vshrl.u32 %v501, 7
        %v503 = vsub.s32 %v341, %v502
        %v504 = vrot.slane %v487, %v503
        %v505 = vlaneseq
        %v506 = vshrl.u32 %v505, 7
        %v507 = vsub.s32 %v341, %v506
        %v508 = vrot.slane %v490, %v507
        %v509 = vlaneseq
        %v510 = vshrl.u32 %v509, 7
        %v511 = vsub.s32 %v341, %v510
        %v512 = vrot.slane %v493, %v511
        %v513 = vlaneseq
        %v514 = vshrl.u32 %v513, 7
        %v515 = vsub.s32 %v341, %v514
        %v516 = vrot.slane %v496, %v515
        %v517 = vsel %vm470, %v508, %v504
        %v518 = vsel %vm472, %v512, %v517
        %v519 = vsel %vm474, %v516, %v518
        %v521 = vsel %vm477, %v519, 0.0
        %522 = vadd.xlane.f32.xlu0 %v521
        %v523 = vpop.xlane.xlu0 %522
        %v524 = vsel %vm397, 1, 0
        %v525 = vsel %vm398, 1, 0
        %v526 = vsel %vm399, 1, 0
        %v527 = vsel %vm400, 1, 0
        %v528 = vcvt.s32.f32 %v524
        %v529 = vcvt.s32.f32 %v525
        %v530 = vcvt.s32.f32 %v526
        %v531 = vcvt.s32.f32 %v527
        %v532 = vsel %vm362, %v528, 0.0
        %533 = vadd.xlane.f32.xlu0 %v532
        %v534 = vpop.xlane.xlu0 %533
        %v535 = vsel %vm362, %v529, 0.0
        %536 = vadd.xlane.f32.xlu0 %v535
        %v537 = vpop.xlane.xlu0 %536
        %v538 = vsel %vm362, %v530, 0.0
        %539 = vadd.xlane.f32.xlu0 %v538
        %v540 = vpop.xlane.xlu0 %539
        %v541 = vsel %vm362, %v531, 0.0
        %542 = vadd.xlane.f32.xlu0 %v541
        %v543 = vpop.xlane.xlu0 %542
        %v548 = vlaneseq
        %v549 = vshrl.u32 %v548, 7
        %v550 = vsub.s32 %v341, %v549
        %v551 = vrot.slane %v534, %v550
        %v552 = vlaneseq
        %v553 = vshrl.u32 %v552, 7
        %v554 = vsub.s32 %v341, %v553
        %v555 = vrot.slane %v537, %v554
        %v556 = vlaneseq
        %v557 = vshrl.u32 %v556, 7
        %v558 = vsub.s32 %v341, %v557
        %v559 = vrot.slane %v540, %v558
        %v560 = vlaneseq
        %v561 = vshrl.u32 %v560, 7
        %v562 = vsub.s32 %v341, %v561
        %v563 = vrot.slane %v543, %v562
        %v564 = vsel %vm470, %v555, %v551
        %v565 = vsel %vm472, %v559, %v564
        %v566 = vsel %vm474, %v563, %v565
        %v568 = vsel %vm477, %v566, 0.0
        %569 = vadd.xlane.f32.xlu0 %v568
        %v570 = vpop.xlane.xlu0 %569
        %v571 = vld [vmem:[%s322] sm:$0xf]
        %v572 = vadd.f32 %v571, %v480
        %vm573 = vcmask 3072
        %574 = vst.msk [vmem:[%s322] sm:$0xf] %vm573, %v572
        %v575 = vld [vmem:[%s318] sm:$0xf]
        %v576 = vadd.f32 %v575, %v523
        %577 = vst.msk [vmem:[%s318] sm:$0xf] %vm573, %v576
        %v578 = vld [vmem:[%s326] sm:$0xf]
        %v579 = vadd.f32 %v578, %v570
        %580 = vst.msk [vmem:[%s326] sm:$0xf] %vm573, %v579
        %p581 = scmp.lt.s32.totalorder %s27, 1
        %s582 = scalar_select %p581, %s27, 1
        %s583 = scalar_lea.vmem %s2, %s582
        %p584 = scmp.lt.s32.totalorder %s27, 1
        %s585 = scalar_select %p584, %s27, 1
        %s586 = smul.addr %s585, 4
        %s587 = scalar_lea.vmem %s3, %s586
        %p588 = scmp.lt.s32.totalorder %s27, 1
        %s589 = scalar_select %p588, %s27, 1
        %s590 = smul.addr %s589, 4
        %s591 = scalar_lea.vmem %s4, %s590
        %p592 = scmp.lt.s32.totalorder %s27, 1
        %s593 = scalar_select %p592, %s27, 1
        %s594 = smul.addr %s593, 4
        %s595 = scalar_lea.vmem %s5, %s594
        // Predicated region
        $region41: #{tpu_custom_call.1} parent=27 // pred_check
          %p596 = pneg %p109
        $region42: #{tpu_custom_call.1} parent=27 // pred_check_branch
          %598 = sbr.rel (%p596) target = $region44
        $region43: #{tpu_custom_call.1} parent=27 // pred_region
          _
        $region44: #{tpu_custom_call.1} parent=27 // pred_fallthru
          _
        // Predicated region
        $region45: #{tpu_custom_call.1} parent=27 // pred_check
          %p599 = pneg %p135
        $region46: #{tpu_custom_call.1} parent=27 // pred_check_branch
          %601 = sbr.rel (%p599) target = $region48
        $region47: #{tpu_custom_call.1} parent=27 // pred_region
          _
        $region48: #{tpu_custom_call.1} parent=27 // pred_fallthru
          _
        // Predicated region
        $region49: #{tpu_custom_call.1} parent=27 // pred_check
          %p602 = pneg %p161
        $region50: #{tpu_custom_call.1} parent=27 // pred_check_branch
          %604 = sbr.rel (%p602) target = $region52
        $region51: #{tpu_custom_call.1} parent=27 // pred_region
          _
        $region52: #{tpu_custom_call.1} parent=27 // pred_fallthru
          _
        // Predicated region
        $region53: #{tpu_custom_call.1} parent=27 // pred_check
          %p605 = pneg %p187
        $region54: #{tpu_custom_call.1} parent=27 // pred_check_branch
          %607 = sbr.rel (%p605) target = $region56
        $region55: #{tpu_custom_call.1} parent=27 // pred_region
          _
        $region56: #{tpu_custom_call.1} parent=27 // pred_fallthru
          _
      $region28: #{tpu_custom_call.1} parent=5 // pred_fallthru
        _
      %p608 = scmp.le.s32.totalorder 2, %s18
      // Predicated region
      $region57: #{tpu_custom_call.1} parent=5 // pred_check
        %p609 = pneg %p608
      $region58: #{tpu_custom_call.1} parent=5 // pred_check_branch
        %611 = sbr.rel (%p609) target = $region60
      $region59: #{tpu_custom_call.1} parent=5 // pred_region
        %s612 = ssub.s32 %s18, 2
        // Predicated region
        $region61: #{tpu_custom_call.1} parent=59 // pred_check
          %p613 = pneg %p115
        $region62: #{tpu_custom_call.1} parent=59 // pred_check_branch
          %615 = sbr.rel (%p613) target = $region64
        $region63: #{tpu_custom_call.1} parent=59 // pred_region
          %p616 = scmp.lt.s32.totalorder %s29, 1
          %s617 = scalar_select %p616, %s29, 1
          %s618 = scalar_lea.vmem %s2, %s617
        $region64: #{tpu_custom_call.1} parent=59 // pred_fallthru
          _
        // Predicated region
        $region65: #{tpu_custom_call.1} parent=59 // pred_check
          %p619 = pneg %p141
        $region66: #{tpu_custom_call.1} parent=59 // pred_check_branch
          %621 = sbr.rel (%p619) target = $region68
        $region67: #{tpu_custom_call.1} parent=59 // pred_region
          %p622 = scmp.lt.s32.totalorder %s29, 1
          %s623 = scalar_select %p622, %s29, 1
          %s624 = smul.addr %s623, 4
          %s625 = scalar_lea.vmem %s3, %s624
        $region68: #{tpu_custom_call.1} parent=59 // pred_fallthru
          _
        // Predicated region
        $region69: #{tpu_custom_call.1} parent=59 // pred_check
          %p626 = pneg %p167
        $region70: #{tpu_custom_call.1} parent=59 // pred_check_branch
          %628 = sbr.rel (%p626) target = $region72
        $region71: #{tpu_custom_call.1} parent=59 // pred_region
          %p629 = scmp.lt.s32.totalorder %s29, 1
          %s630 = scalar_select %p629, %s29, 1
          %s631 = smul.addr %s630, 4
          %s632 = scalar_lea.vmem %s4, %s631
        $region72: #{tpu_custom_call.1} parent=59 // pred_fallthru
          _
        // Predicated region
        $region73: #{tpu_custom_call.1} parent=59 // pred_check
          %p633 = pneg %p193
        $region74: #{tpu_custom_call.1} parent=59 // pred_check_branch
          %635 = sbr.rel (%p633) target = $region76
        $region75: #{tpu_custom_call.1} parent=59 // pred_region
          %p636 = scmp.lt.s32.totalorder %s29, 1
          %s637 = scalar_select %p636, %s29, 1
          %s638 = smul.addr %s637, 4
          %s639 = scalar_lea.vmem %s5, %s638
        $region76: #{tpu_custom_call.1} parent=59 // pred_fallthru
          _
      $region60: #{tpu_custom_call.1} parent=5 // pred_fallthru
        _
    $region6: #{tpu_custom_call.1} parent=1 // loop_footer
      %s22 = sadd.s32 1, %s18
    $region7: #{tpu_custom_call.1} parent=1 // loop_footer_branch
      %17 = sbr.rel target = $region3
    $region8: #{tpu_custom_call.1} parent=1 // loop_exit
      _
    %640 = vsyncpa [#allocation3], 1
    %s641 = scalar_lea.sflag [#allocation3], 1
    %642 = vsyncpa %s641, 1
    %643 = vsyncpa [#allocation5], 1
    %s644 = scalar_lea.sflag [#allocation5], 1
    %645 = vsyncpa %s644, 1

</llo_original>
